<compile_context>
chip_gen: v7x
topology: tpu7x:2x2x1
jax: 0.10.0
libtpu: 0.0.40
codegen_flags: <defaults>
</compile_context>

<pallas_src>
import math

import jax
import jax.numpy as jnp
from jax.experimental import pallas as pl
from jax.experimental.pallas import tpu as pltpu


def _round_up(n, m):
    return ((n + m - 1) // m) * m


def _softplus(x):
    # Matches torch.nn.Softplus(beta=1, threshold=20):
    # returns x when x > 20, else log(1 + exp(x)).  Exactly two EUP pushes
    # (exp + log1p) per element.
    safe = jnp.minimum(x, 20.0)
    return jnp.where(x > 20.0, x, jnp.log1p(jnp.exp(safe)))


def _mlp_kernel(x_ref, w1_ref, b1_ref, w2_ref, b2_ref, w3t_ref, b3_ref, o_ref):
    # hidden layer 1: Linear + Softplus   (MXU + VPU/EUP)
    h = jnp.dot(x_ref[...], w1_ref[...], preferred_element_type=jnp.float32)
    h = _softplus(h + b1_ref[...])
    # hidden layer 2: Linear + Softplus
    h = jnp.dot(h, w2_ref[...], preferred_element_type=jnp.float32)
    h = _softplus(h + b2_ref[...])
    # output layer (width 1): contract (1, H2) x (tile, H2) over the hidden
    # axis so the result is a lane-dense (1, tile) row -> unmasked full-lane
    # stores, no (tile, 1) masked-store path.
    o = jax.lax.dot_general(
        w3t_ref[...], h, (((1,), (1,)), ((), ())),
        preferred_element_type=jnp.float32)          # (1, tile)
    o_ref[...] = (o + b3_ref[...]).astype(o_ref.dtype)


def mlp_forward(x, params, *, batch_tile=None):
    """x: (B, input_size) float32.  params: dict of (W, b) per layer.
    Returns (B, 1) float32."""
    B, in_dim = x.shape
    w1, b1 = params["w1"], params["b1"]
    w2, b2 = params["w2"], params["b2"]
    w3, b3 = params["w3"], params["b3"]
    w3t = w3.T  # (1, hidden2): row vector for the lane-dense final layer

    if batch_tile is None:
        # Small batches: one grid step (no pointless tiling / per-step cost).
        # Large batches: 1024-row tiles (fits VMEM on v5e/v6e/v7x with big
        # headroom; multiple grid steps keep both v7x TensorCores busy).
        batch_tile = 1024 if B > 1024 else _round_up(B, 8)
    batch_tile = _round_up(batch_tile, 8)
    if batch_tile < B:
        # Multi-step grid: lane-dense output block needs a multiple of 128.
        batch_tile = _round_up(batch_tile, 128)

    Bp = _round_up(B, batch_tile)
    num_tiles = Bp // batch_tile
    if Bp != B:
        x = jnp.pad(x, ((0, Bp - B), (0, 0)))

    def _full(arr):
        # whole-array block, resident across all batch tiles
        return pl.BlockSpec(arr.shape, lambda i: (0, 0))

    out_row = pl.pallas_call(
        _mlp_kernel,
        out_shape=jax.ShapeDtypeStruct((1, Bp), jnp.float32),
        grid_spec=pltpu.PrefetchScalarGridSpec(
            num_scalar_prefetch=0,
            grid=(num_tiles,),
            in_specs=[
                pl.BlockSpec((batch_tile, in_dim), lambda i: (i, 0)),
                _full(w1), _full(b1),
                _full(w2), _full(b2),
                _full(w3t), _full(b3),
            ],
            # batch on the lane axis -> lane-dense stores
            out_specs=pl.BlockSpec((1, batch_tile), lambda i: (0, i)),
        ),
        compiler_params=pltpu.CompilerParams(
            dimension_semantics=("parallel",)),
    )(x, w1, b1, w2, b2, w3t, b3)

    return out_row.reshape(Bp, 1)[:B]


def init_params(key, input_size, hidden_sizes):
    """Deterministic init mimicking torch.nn.Linear defaults:
    U(-1/sqrt(fan_in), 1/sqrt(fan_in)) for both weight and bias.
    Weights stored as (in, out) (already transposed)."""
    dims = [input_size] + list(hidden_sizes) + [1]
    params = {}
    for li, (fan_in, fan_out) in enumerate(zip(dims[:-1], dims[1:]), start=1):
        key, kw, kb = jax.random.split(key, 3)
        bound = 1.0 / math.sqrt(fan_in)
        params[f"w{li}"] = jax.random.uniform(
            kw, (fan_in, fan_out), jnp.float32, minval=-bound, maxval=bound)
        params[f"b{li}"] = jax.random.uniform(
            kb, (1, fan_out), jnp.float32, minval=-bound, maxval=bound)
    return params


def reference_forward(x, params):
    h = _softplus(x @ params["w1"] + params["b1"])
    h = _softplus(h @ params["w2"] + params["b2"])
    return h @ params["w3"] + params["b3"]


if __name__ == "__main__":
    # nn_config-equivalent: input_size=32, hidden_sizes=[64, 32]
    input_size = 32
    hidden_sizes = [64, 32]

    key = jax.random.PRNGKey(0)
    params = init_params(key, input_size, hidden_sizes)

    # --- small demo batch: single grid step ---
    batch = 16
    key, kx = jax.random.split(key)
    x = jax.random.normal(kx, (batch, input_size), jnp.float32)

    out = jax.block_until_ready(mlp_forward(x, params))
    ref = reference_forward(x, params)
    assert out.shape == (batch, 1)
    assert jnp.allclose(out, ref, atol=1e-5, rtol=1e-5), (
        f"max abs err {jnp.max(jnp.abs(out - ref))}")

    # --- multi-tile / padded path check (non-divisible batch, forced tiling) ---
    batch2 = 300
    key, kx2 = jax.random.split(key)
    x2 = jax.random.normal(kx2, (batch2, input_size), jnp.float32)
    out2 = jax.block_until_ready(mlp_forward(x2, params, batch_tile=128))
    ref2 = reference_forward(x2, params)
    assert out2.shape == (batch2, 1)
    assert jnp.allclose(out2, ref2, atol=1e-5, rtol=1e-5), (
        f"max abs err {jnp.max(jnp.abs(out2 - ref2))}")

    print("KERNEL_OK")
</pallas_src>

<mosaic_0001>
module attributes {stable_mosaic.version = 11 : i64} {
  func.func @_mlp_kernel(%arg0: i32, %arg1: memref<16x32xf32, #tpu.memory_space<vmem>>, %arg2: memref<32x64xf32, #tpu.memory_space<vmem>>, %arg3: memref<1x64xf32, #tpu.memory_space<vmem>>, %arg4: memref<64x32xf32, #tpu.memory_space<vmem>>, %arg5: memref<1x32xf32, #tpu.memory_space<vmem>>, %arg6: memref<1x32xf32, #tpu.memory_space<vmem>>, %arg7: memref<1x1xf32, #tpu.memory_space<vmem>>, %arg8: memref<1x16xf32, #tpu.memory_space<vmem>>) attributes {dimension_semantics = [#tpu.dimension_semantics<parallel>], iteration_bounds = array<i64: 1>, scalar_prefetch = 0 : i64, scratch_operands = 0 : i64, tpu.core_type = #tpu.core_type<tc>, window_params = [{transform_indices = @transform_0, window_bounds = array<i64: 16, 32>}, {pipeline_mode = #tpu.pipeline_mode<synchronous>, transform_indices = @transform_1, window_bounds = array<i64: 32, 64>}, {pipeline_mode = #tpu.pipeline_mode<synchronous>, transform_indices = @transform_2, window_bounds = array<i64: 1, 64>}, {pipeline_mode = #tpu.pipeline_mode<synchronous>, transform_indices = @transform_3, window_bounds = array<i64: 64, 32>}, {pipeline_mode = #tpu.pipeline_mode<synchronous>, transform_indices = @transform_4, window_bounds = array<i64: 1, 32>}, {pipeline_mode = #tpu.pipeline_mode<synchronous>, transform_indices = @transform_5, window_bounds = array<i64: 1, 32>}, {pipeline_mode = #tpu.pipeline_mode<synchronous>, transform_indices = @transform_6, window_bounds = array<i64: 1, 1>}, {transform_indices = @transform_7, window_bounds = array<i64: 1, 16>}]} {
    %c0 = arith.constant 0 : index
    %c0_0 = arith.constant 0 : index
    %0 = vector.load %arg1[%c0, %c0_0] : memref<16x32xf32, #tpu.memory_space<vmem>>, vector<16x32xf32>
    %c0_1 = arith.constant 0 : index
    %c0_2 = arith.constant 0 : index
    %1 = vector.load %arg2[%c0_1, %c0_2] : memref<32x64xf32, #tpu.memory_space<vmem>>, vector<32x64xf32>
    %cst = arith.constant dense<0.000000e+00> : vector<16x64xf32>
    %2 = tpu.matmul %0, %1, %cst {dimension_numbers = #tpu.dot_dimension_numbers<[1], [0], [0], [1], [0, 0, 1, 1], [], []>} : vector<16x32xf32>, vector<32x64xf32>, vector<16x64xf32> -> vector<16x64xf32>
    %c0_3 = arith.constant 0 : index
    %c0_4 = arith.constant 0 : index
    %3 = vector.load %arg3[%c0_3, %c0_4] : memref<1x64xf32, #tpu.memory_space<vmem>>, vector<1x64xf32>
    %4 = vector.broadcast %3 : vector<1x64xf32> to vector<16x64xf32>
    %5 = arith.addf %2, %4 : vector<16x64xf32>
    %cst_5 = arith.constant 2.000000e+01 : f32
    %6 = vector.broadcast %cst_5 : f32 to vector<16x64xf32>
    %7 = arith.minimumf %5, %6 : vector<16x64xf32>
    %cst_6 = arith.constant 2.000000e+01 : f32
    %8 = vector.broadcast %cst_6 : f32 to vector<16x64xf32>
    %9 = arith.cmpf ogt, %5, %8 : vector<16x64xf32>
    %10 = math.exp %7 : vector<16x64xf32>
    %11 = math.log1p %10 : vector<16x64xf32>
    %12 = arith.select %9, %5, %11 : vector<16x64xi1>, vector<16x64xf32>
    %c0_7 = arith.constant 0 : index
    %c0_8 = arith.constant 0 : index
    %13 = vector.load %arg4[%c0_7, %c0_8] : memref<64x32xf32, #tpu.memory_space<vmem>>, vector<64x32xf32>
    %cst_9 = arith.constant dense<0.000000e+00> : vector<16x32xf32>
    %14 = tpu.matmul %12, %13, %cst_9 {dimension_numbers = #tpu.dot_dimension_numbers<[1], [0], [0], [1], [0, 0, 1, 1], [], []>} : vector<16x64xf32>, vector<64x32xf32>, vector<16x32xf32> -> vector<16x32xf32>
    %c0_10 = arith.constant 0 : index
    %c0_11 = arith.constant 0 : index
    %15 = vector.load %arg5[%c0_10, %c0_11] : memref<1x32xf32, #tpu.memory_space<vmem>>, vector<1x32xf32>
    %16 = vector.broadcast %15 : vector<1x32xf32> to vector<16x32xf32>
    %17 = arith.addf %14, %16 : vector<16x32xf32>
    %cst_12 = arith.constant 2.000000e+01 : f32
    %18 = vector.broadcast %cst_12 : f32 to vector<16x32xf32>
    %19 = arith.minimumf %17, %18 : vector<16x32xf32>
    %cst_13 = arith.constant 2.000000e+01 : f32
    %20 = vector.broadcast %cst_13 : f32 to vector<16x32xf32>
    %21 = arith.cmpf ogt, %17, %20 : vector<16x32xf32>
    %22 = math.exp %19 : vector<16x32xf32>
    %23 = math.log1p %22 : vector<16x32xf32>
    %24 = arith.select %21, %17, %23 : vector<16x32xi1>, vector<16x32xf32>
    %c0_14 = arith.constant 0 : index
    %c0_15 = arith.constant 0 : index
    %25 = vector.load %arg6[%c0_14, %c0_15] : memref<1x32xf32, #tpu.memory_space<vmem>>, vector<1x32xf32>
    %cst_16 = arith.constant dense<0.000000e+00> : vector<1x16xf32>
    %26 = tpu.matmul %25, %24, %cst_16 {dimension_numbers = #tpu.dot_dimension_numbers<[1], [1], [0], [0], [0, 0, 1, 0], [], []>} : vector<1x32xf32>, vector<16x32xf32>, vector<1x16xf32> -> vector<1x16xf32>
    %c0_17 = arith.constant 0 : index
    %c0_18 = arith.constant 0 : index
    %27 = vector.load %arg7[%c0_17, %c0_18] : memref<1x1xf32, #tpu.memory_space<vmem>>, vector<1x1xf32>
    %28 = vector.broadcast %27 : vector<1x1xf32> to vector<1x16xf32>
    %29 = arith.addf %26, %28 : vector<1x16xf32>
    %c0_19 = arith.constant 0 : index
    %c0_20 = arith.constant 0 : index
    %30 = vector.load %arg8[%c0_19, %c0_20] : memref<1x16xf32, #tpu.memory_space<vmem>>, vector<1x16xf32>
    tpu.vector_store %arg8[%c0_19, %c0_20], %29 {strides = array<i32>} : memref<1x16xf32, #tpu.memory_space<vmem>>, vector<1x16xf32>,
    return
  }
  func.func @transform_0(%arg0: i32) -> (i32, i32) {
    %c0_i32 = arith.constant 0 : i32
    %c0_i32_0 = arith.constant 0 : i32
    return %arg0, %c0_i32 : i32, i32
  }
  func.func @transform_1(%arg0: i32) -> (i32, i32) {
    %c0_i32 = arith.constant 0 : i32
    %c0_i32_0 = arith.constant 0 : i32
    %c0_i32_1 = arith.constant 0 : i32
    return %c0_i32, %c0_i32_0 : i32, i32
  }
  func.func @transform_2(%arg0: i32) -> (i32, i32) {
    %c0_i32 = arith.constant 0 : i32
    %c0_i32_0 = arith.constant 0 : i32
    %c0_i32_1 = arith.constant 0 : i32
    return %c0_i32, %c0_i32_0 : i32, i32
  }
  func.func @transform_3(%arg0: i32) -> (i32, i32) {
    %c0_i32 = arith.constant 0 : i32
    %c0_i32_0 = arith.constant 0 : i32
    %c0_i32_1 = arith.constant 0 : i32
    return %c0_i32, %c0_i32_0 : i32, i32
  }
  func.func @transform_4(%arg0: i32) -> (i32, i32) {
    %c0_i32 = arith.constant 0 : i32
    %c0_i32_0 = arith.constant 0 : i32
    %c0_i32_1 = arith.constant 0 : i32
    return %c0_i32, %c0_i32_0 : i32, i32
  }
  func.func @transform_5(%arg0: i32) -> (i32, i32) {
    %c0_i32 = arith.constant 0 : i32
    %c0_i32_0 = arith.constant 0 : i32
    %c0_i32_1 = arith.constant 0 : i32
    return %c0_i32, %c0_i32_0 : i32, i32
  }
  func.func @transform_6(%arg0: i32) -> (i32, i32) {
    %c0_i32 = arith.constant 0 : i32
    %c0_i32_0 = arith.constant 0 : i32
    %c0_i32_1 = arith.constant 0 : i32
    return %c0_i32, %c0_i32_0 : i32, i32
  }
  func.func @transform_7(%arg0: i32) -> (i32, i32) {
    %c0_i32 = arith.constant 0 : i32
    %c0_i32_0 = arith.constant 0 : i32
    return %c0_i32, %arg0 : i32, i32
  }
}

</mosaic_0001>

<llo_original>
// kernel: tpu_custom_call.1
$region0: #{tpu_custom_call.1}
  #allocation0 [shape = 'u32[]', space=smem, size = 0x4, offset = 0x4, fixed_abs, tag = 'smem constant byte address 0x4 - core index']
  #allocation1 [shape = 'u32[144,128]{1,0:T(1,128)}', space=vmem, size = 0x12000, scoped, tag = 'internal scratch']
  #allocation2 [shape = 'f32[1,1]{1,0:T(1,128)S(1)}', space=vmem, size = 0x200, scoped, tag = 'scoped memory for tpu_custom_call.1']
  %s0 = inlined_call_operand.vmem [shape: f32[16,32], index: 0, kind: input, shape index: {}]
  %s1 = inlined_call_operand.vmem [shape: f32[32,64], index: 1, kind: input, shape index: {}]
  %s2 = inlined_call_operand.vmem [shape: f32[1,64], index: 2, kind: input, shape index: {}]
  %s3 = inlined_call_operand.vmem [shape: f32[64,32], index: 3, kind: input, shape index: {}]
  %s4 = inlined_call_operand.vmem [shape: f32[1,32], index: 4, kind: input, shape index: {}]
  %s5 = inlined_call_operand.vmem [shape: f32[1,32], index: 5, kind: input, shape index: {}]
  %s6 = inlined_call_operand.<no memory space> [shape: f32[1,1], index: 6, kind: input, shape index: {}]
  %s7 = inlined_call_operand.hbm [shape: f32[1,16], index: 7, kind: output, shape index: {}]
  %s8 = sld [smem:[#allocation0]]
  $region38: #{tpu_custom_call.1} parent=0
    _
  %s10 = ssub.s32 1, %s8
  %s11 = scalar_select 0, %s10, %s8
  %v12 = vstv %s6
  %13 = vst [vmem:[#allocation2] sm:$0x1] %v12
  $region1: #{tpu_custom_call.1} parent=0
    #allocation3 [shape = 'u8[512]{0}', space=vmem, size = 0x400, scoped, tag = 'output window, operand 0, single buffered']
    #allocation4 [shape = 's32[1]{0}', space=sflag, size = 0x4, scoped, tag = 'scoped memory for tpu_custom_call.1']
    %14 = vsyncpa [#allocation4], 0
    // Predicated region
    $region2: #{tpu_custom_call.1} parent=1 // pred_check
      _
    $region3: #{tpu_custom_call.1} parent=1 // pred_check_branch
      %16 = sbr.rel (0) target = $region5
    $region4: #{tpu_custom_call.1} parent=1 // pred_region
      _
    $region5: #{tpu_custom_call.1} parent=1 // pred_fallthru
      _
    // Predicated region
    $region6: #{tpu_custom_call.1} parent=1 // pred_check
      _
    $region7: #{tpu_custom_call.1} parent=1 // pred_check_branch
      %18 = sbr.rel (0) target = $region9
    $region8: #{tpu_custom_call.1} parent=1 // pred_region
      _
    $region9: #{tpu_custom_call.1} parent=1 // pred_fallthru
      _
    // Predicated region
    $region10: #{tpu_custom_call.1} parent=1 // pred_check
      _
    $region11: #{tpu_custom_call.1} parent=1 // pred_check_branch
      %20 = sbr.rel (0) target = $region13
    $region12: #{tpu_custom_call.1} parent=1 // pred_region
      _
    $region13: #{tpu_custom_call.1} parent=1 // pred_fallthru
      _
    // Predicated region
    $region14: #{tpu_custom_call.1} parent=1 // pred_check
      _
    $region15: #{tpu_custom_call.1} parent=1 // pred_check_branch
      %22 = sbr.rel (0) target = $region17
    $region16: #{tpu_custom_call.1} parent=1 // pred_region
      _
    $region17: #{tpu_custom_call.1} parent=1 // pred_fallthru
      _
    // Predicated region
    $region18: #{tpu_custom_call.1} parent=1 // pred_check
      _
    $region19: #{tpu_custom_call.1} parent=1 // pred_check_branch
      %24 = sbr.rel (0) target = $region21
    $region20: #{tpu_custom_call.1} parent=1 // pred_region
      _
    $region21: #{tpu_custom_call.1} parent=1 // pred_fallthru
      _
    // Predicated region
    $region22: #{tpu_custom_call.1} parent=1 // pred_check
      _
    $region23: #{tpu_custom_call.1} parent=1 // pred_check_branch
      %26 = sbr.rel (0) target = $region25
    $region24: #{tpu_custom_call.1} parent=1 // pred_region
      _
    $region25: #{tpu_custom_call.1} parent=1 // pred_fallthru
      _
    // Predicated region
    $region26: #{tpu_custom_call.1} parent=1 // pred_check
      _
    $region27: #{tpu_custom_call.1} parent=1 // pred_check_branch
      %28 = sbr.rel (0) target = $region29
    $region28: #{tpu_custom_call.1} parent=1 // pred_region
      _
    $region29: #{tpu_custom_call.1} parent=1 // pred_fallthru
      _
    %v29 = vld [vmem:[%s0] sm:$0xff]
    %v30 = vld [vmem:[%s0 + $0x8] sm:$0xff]
    %v31 = vld [vmem:[%s1] sm:$0xff]
    %v32 = vld [vmem:[%s1 + $0x8] sm:$0xff]
    %v33 = vld [vmem:[%s1 + $0x10] sm:$0xff]
    %v34 = vld [vmem:[%s1 + $0x18] sm:$0xff]
    %v35 = vld [vmem:[%s2] sm:$0x1]
    %v37 = vlaneseq
    %v38 = vshrl.u32 %v37, 7
    %v39 = vsub.s32 0, %v38
    %v40 = vrot.slane %v35, %v39
    %vm42 = vcmask 261120
    %v44 = vsel %vm42, %v29, 0
    %v47 = vsel %vm42, %v30, 0
    %49 = vmatprep.subr.mxu0 0.0
    %50 = vmatpush1.msra.mxu0 %v31
    %51 = vmatprep.subr.mxu0 0.0
    %52 = vmatpush1.msra.mxu0 %v32
    %53 = vmatprep.subr.mxu0 0.0
    %54 = vmatpush1.msra.mxu0 %v33
    %55 = vmatprep.subr.mxu0 0.0
    %56 = vmatpush1.msra.mxu0 %v34
    %57 = vmatprep.subr.mxu0 0.0
    %58 = vmatpush1.msra.mxu0 0.0
    %59 = vmatprep.subr.mxu0 0.0
    %60 = vmatpush1.msra.mxu0 0.0
    %61 = vmatprep.subr.mxu0 0.0
    %62 = vmatpush1.msra.mxu0 0.0
    %63 = vmatprep.subr.mxu0 0.0
    %64 = vmatpush1.msra.mxu0 0.0
    %65 = vmatprep.subr.mxu0 0.0
    %66 = vmatpush1.msra.mxu0 0.0
    %67 = vmatprep.subr.mxu0 0.0
    %68 = vmatpush1.msra.mxu0 0.0
    %69 = vmatprep.subr.mxu0 0.0
    %70 = vmatpush1.msra.mxu0 0.0
    %71 = vmatprep.subr.mxu0 0.0
    %72 = vmatpush1.msra.mxu0 0.0
    %73 = vmatprep.subr.mxu0 0.0
    %74 = vmatpush1.msra.mxu0 0.0
    %75 = vmatprep.subr.mxu0 0.0
    %76 = vmatpush1.msra.mxu0 0.0
    %77 = vmatprep.subr.mxu0 0.0
    %78 = vmatpush1.msra.mxu0 0.0
    %79 = vmatprep.subr.mxu0 0.0
    %80 = vmatpush1.msra.mxu0 0.0
    %81 = vmatprep.subr.mxu0 0.0
    %82 = vmatpush1.msra.mxu0 0.0
    %83 = vmatprep.subr.mxu0 0.0
    %84 = vmatpush1.msra.mxu0 0.0
    %85 = vmatprep.subr.mxu0 0.0
    %86 = vmatpush1.msra.mxu0 0.0
    %87 = vmatprep.subr.mxu0 0.0
    %88 = vmatpush1.msra.mxu0 0.0
    %89 = vmatprep.subr.mxu0 0.0
    %90 = vmatpush1.msra.mxu0 0.0
    %91 = vmatprep.subr.mxu0 0.0
    %92 = vmatpush1.msra.mxu0 0.0
    %93 = vmatprep.subr.mxu0 0.0
    %94 = vmatpush1.msra.mxu0 0.0
    %95 = vmatprep.subr.mxu0 0.0
    %96 = vmatpush1.msra.mxu0 0.0
    %97 = vmatprep.subr.mxu0 0.0
    %98 = vmatpush1.msra.mxu0 0.0
    %99 = vmatprep.subr.mxu0 0.0
    %100 = vmatpush1.msra.mxu0 0.0
    %101 = vmatprep.subr.mxu0 0.0
    %102 = vmatpush1.msra.mxu0 0.0
    %103 = vmatprep.subr.mxu0 0.0
    %104 = vmatpush1.msra.mxu0 0.0
    %105 = vmatprep.subr.mxu0 0.0
    %106 = vmatpush1.msra.mxu0 0.0
    %107 = vmatprep.subr.mxu0 0.0
    %108 = vmatpush1.msra.mxu0 0.0
    %109 = vmatprep.subr.mxu0 0.0
    %110 = vmatpush1.msra.mxu0 0.0
    %111 = vmatprep.subr.mxu0 0.0
    %112 = vmatpush1.msra.mxu0 0.0
    %113 = vmatprep.mubr.f32.mxu0 0.0
    %114 = vmatmul.mubr.f32.gmra.mrb[0].mxu0 %v44
    %v115 = vpop.f32.mrb[0].mxu0
    %v116 = vadd.f32 %v40, %v115
    %v117 = vpop.f32.mrb[0].mxu0
    %118 = vmatprep.mubr.f32.mxu0 0.0
    %119 = vmatmul.mubr.f32.gmra.mrb[0].mxu0 %v47
    %v120 = vpop.f32.mrb[0].mxu0
    %v121 = vadd.f32 %v40, %v120
    %v122 = vpop.f32.mrb[0].mxu0
    %123 = vdwg.mxu0
    %v124 = vmin.f32 %v116, 20.0
    %v125 = vmin.f32 %v121, 20.0
    %vm126 = vcmp.gt.f32.partialorder %v116, 20.0
    %vm127 = vcmp.gt.f32.partialorder %v121, 20.0
    %v128 = vmul.f32 %v124, 1.442695
    %v129 = vpow.pop %v128
    %v130 = vmul.f32 %v125, 1.442695
    %v131 = vpow.pop %v130
    %v132 = vadd.f32 %v129, 1.0
    %v133 = vlog2.pop %v132
    %v134 = vmul.f32 %v133, 0.6931472
    %v135 = vmul.f32 -0.5, %v129
    %v136 = vadd.f32 %v135, 1.0
    %v137 = vmul.f32 %v136, %v129
    %v138 = vand.u32 2147483647, %v129
    %vm139 = vcmp.lt.f32.partialorder %v138, 0.0004427343
    %v140 = vsel %vm139, %v137, %v134
    %v141 = vadd.f32 %v131, 1.0
    %v142 = vlog2.pop %v141
    %v143 = vmul.f32 %v142, 0.6931472
    %v144 = vmul.f32 -0.5, %v131
    %v145 = vadd.f32 %v144, 1.0
    %v146 = vmul.f32 %v145, %v131
    %v147 = vand.u32 2147483647, %v131
    %vm148 = vcmp.lt.f32.partialorder %v147, 0.0004427343
    %v149 = vsel %vm148, %v146, %v143
    %v150 = vsel %vm126, %v116, %v140
    %v151 = vsel %vm127, %v121, %v149
    %v152 = vld [vmem:[%s3] sm:$0xff]
    %v153 = vld [vmem:[%s3 + $0x8] sm:$0xff]
    %v154 = vld [vmem:[%s3 + $0x10] sm:$0xff]
    %v155 = vld [vmem:[%s3 + $0x18] sm:$0xff]
    %v156 = vld [vmem:[%s3 + $0x20] sm:$0xff]
    %v157 = vld [vmem:[%s3 + $0x28] sm:$0xff]
    %v158 = vld [vmem:[%s3 + $0x30] sm:$0xff]
    %v159 = vld [vmem:[%s3 + $0x38] sm:$0xff]
    %v160 = vld [vmem:[%s4] sm:$0x1]
    %v162 = vlaneseq
    %v163 = vshrl.u32 %v162, 7
    %v164 = vsub.s32 0, %v163
    %v165 = vrot.slane %v160, %v164
    %vm167 = vcmask 523264
    %v169 = vsel %vm167, %v150, 0
    %v172 = vsel %vm167, %v151, 0
    %174 = vmatprep.subr.mxu0 0.0
    %175 = vmatpush1.msra.mxu0 %v152
    %176 = vmatprep.subr.mxu0 0.0
    %177 = vmatpush1.msra.mxu0 %v153
    %178 = vmatprep.subr.mxu0 0.0
    %179 = vmatpush1.msra.mxu0 %v154
    %180 = vmatprep.subr.mxu0 0.0
    %181 = vmatpush1.msra.mxu0 %v155
    %182 = vmatprep.subr.mxu0 0.0
    %183 = vmatpush1.msra.mxu0 %v156
    %184 = vmatprep.subr.mxu0 0.0
    %185 = vmatpush1.msra.mxu0 %v157
    %186 = vmatprep.subr.mxu0 0.0
    %187 = vmatpush1.msra.mxu0 %v158
    %188 = vmatprep.subr.mxu0 0.0
    %189 = vmatpush1.msra.mxu0 %v159
    %190 = vmatprep.subr.mxu0 0.0
    %191 = vmatpush1.msra.mxu0 0.0
    %192 = vmatprep.subr.mxu0 0.0
    %193 = vmatpush1.msra.mxu0 0.0
    %194 = vmatprep.subr.mxu0 0.0
    %195 = vmatpush1.msra.mxu0 0.0
    %196 = vmatprep.subr.mxu0 0.0
    %197 = vmatpush1.msra.mxu0 0.0
    %198 = vmatprep.subr.mxu0 0.0
    %199 = vmatpush1.msra.mxu0 0.0
    %200 = vmatprep.subr.mxu0 0.0
    %201 = vmatpush1.msra.mxu0 0.0
    %202 = vmatprep.subr.mxu0 0.0
    %203 = vmatpush1.msra.mxu0 0.0
    %204 = vmatprep.subr.mxu0 0.0
    %205 = vmatpush1.msra.mxu0 0.0
    %206 = vmatprep.subr.mxu0 0.0
    %207 = vmatpush1.msra.mxu0 0.0
    %208 = vmatprep.subr.mxu0 0.0
    %209 = vmatpush1.msra.mxu0 0.0
    %210 = vmatprep.subr.mxu0 0.0
    %211 = vmatpush1.msra.mxu0 0.0
    %212 = vmatprep.subr.mxu0 0.0
    %213 = vmatpush1.msra.mxu0 0.0
    %214 = vmatprep.subr.mxu0 0.0
    %215 = vmatpush1.msra.mxu0 0.0
    %216 = vmatprep.subr.mxu0 0.0
    %217 = vmatpush1.msra.mxu0 0.0
    %218 = vmatprep.subr.mxu0 0.0
    %219 = vmatpush1.msra.mxu0 0.0
    %220 = vmatprep.subr.mxu0 0.0
    %221 = vmatpush1.msra.mxu0 0.0
    %222 = vmatprep.subr.mxu0 0.0
    %223 = vmatpush1.msra.mxu0 0.0
    %224 = vmatprep.subr.mxu0 0.0
    %225 = vmatpush1.msra.mxu0 0.0
    %226 = vmatprep.subr.mxu0 0.0
    %227 = vmatpush1.msra.mxu0 0.0
    %228 = vmatprep.subr.mxu0 0.0
    %229 = vmatpush1.msra.mxu0 0.0
    %230 = vmatprep.subr.mxu0 0.0
    %231 = vmatpush1.msra.mxu0 0.0
    %232 = vmatprep.subr.mxu0 0.0
    %233 = vmatpush1.msra.mxu0 0.0
    %234 = vmatprep.subr.mxu0 0.0
    %235 = vmatpush1.msra.mxu0 0.0
    %236 = vmatprep.subr.mxu0 0.0
    %237 = vmatpush1.msra.mxu0 0.0
    %238 = vmatprep.mubr.f32.mxu0 0.0
    %239 = vmatmul.mubr.f32.gmra.mrb[0].mxu0 %v169
    %v240 = vpop.f32.mrb[0].mxu0
    %v241 = vadd.f32 %v165, %v240
    %v242 = vpop.f32.mrb[0].mxu0
    %243 = vmatprep.mubr.f32.mxu0 0.0
    %244 = vmatmul.mubr.f32.gmra.mrb[0].mxu0 %v172
    %v245 = vpop.f32.mrb[0].mxu0
    %v246 = vadd.f32 %v165, %v245
    %v247 = vpop.f32.mrb[0].mxu0
    %248 = vdwg.mxu0
    %v249 = vmin.f32 %v241, 20.0
    %v250 = vmin.f32 %v246, 20.0
    %vm251 = vcmp.gt.f32.partialorder %v241, 20.0
    %vm252 = vcmp.gt.f32.partialorder %v246, 20.0
    %v253 = vmul.f32 %v249, 1.442695
    %v254 = vpow.pop %v253
    %v255 = vmul.f32 %v250, 1.442695
    %v256 = vpow.pop %v255
    %v257 = vadd.f32 %v254, 1.0
    %v258 = vlog2.pop %v257
    %v259 = vmul.f32 %v258, 0.6931472
    %v260 = vmul.f32 -0.5, %v254
    %v261 = vadd.f32 %v260, 1.0
    %v262 = vmul.f32 %v261, %v254
    %v263 = vand.u32 2147483647, %v254
    %vm264 = vcmp.lt.f32.partialorder %v263, 0.0004427343
    %v265 = vsel %vm264, %v262, %v259
    %v266 = vadd.f32 %v256, 1.0
    %v267 = vlog2.pop %v266
    %v268 = vmul.f32 %v267, 0.6931472
    %v269 = vmul.f32 -0.5, %v256
    %v270 = vadd.f32 %v269, 1.0
    %v271 = vmul.f32 %v270, %v256
    %v272 = vand.u32 2147483647, %v256
    %vm273 = vcmp.lt.f32.partialorder %v272, 0.0004427343
    %v274 = vsel %vm273, %v271, %v268
    %v275 = vsel %vm251, %v241, %v265
    %v276 = vsel %vm252, %v246, %v274
    %v277 = vld [vmem:[%s5] sm:$0x1]
    %v278 = vld [vmem:[#allocation2] sm:$0x1]
    %280 = vset.pattern.permute.xlu0 0
    %281 = vperm.xlu0 %280, %v278
    %v282 = vpop.permute.xlu0 %281
    %v284 = vlaneseq
    %v285 = vshrl.u32 %v284, 7
    %v286 = vsub.s32 0, %v285
    %v287 = vrot.slane %v282, %v286
    %v289 = vsel %vm42, %v277, 0
    %v292 = vsel %vm42, %v275, 0
    %v295 = vsel %vm42, %v276, 0
    %297 = vmatprep.subr.mxu0 0.0
    %298 = vmatpush1.xpose.msra.mxu0 %v292
    %299 = vmatprep.subr.mxu0 0.0
    %300 = vmatpush1.xpose.msra.mxu0 %v295
    %301 = vmatprep.subr.mxu0 0.0
    %302 = vmatpush1.xpose.msra.mxu0 0.0
    %303 = vmatprep.subr.mxu0 0.0
    %304 = vmatpush1.xpose.msra.mxu0 0.0
    %305 = vmatprep.subr.mxu0 0.0
    %306 = vmatpush1.xpose.msra.mxu0 0.0
    %307 = vmatprep.subr.mxu0 0.0
    %308 = vmatpush1.xpose.msra.mxu0 0.0
    %309 = vmatprep.subr.mxu0 0.0
    %310 = vmatpush1.xpose.msra.mxu0 0.0
    %311 = vmatprep.subr.mxu0 0.0
    %312 = vmatpush1.xpose.msra.mxu0 0.0
    %313 = vmatprep.subr.mxu0 0.0
    %314 = vmatpush1.xpose.msra.mxu0 0.0
    %315 = vmatprep.subr.mxu0 0.0
    %316 = vmatpush1.xpose.msra.mxu0 0.0
    %317 = vmatprep.subr.mxu0 0.0
    %318 = vmatpush1.xpose.msra.mxu0 0.0
    %319 = vmatprep.subr.mxu0 0.0
    %320 = vmatpush1.xpose.msra.mxu0 0.0
    %321 = vmatprep.subr.mxu0 0.0
    %322 = vmatpush1.xpose.msra.mxu0 0.0
    %323 = vmatprep.subr.mxu0 0.0
    %324 = vmatpush1.xpose.msra.mxu0 0.0
    %325 = vmatprep.subr.mxu0 0.0
    %326 = vmatpush1.xpose.msra.mxu0 0.0
    %327 = vmatprep.subr.mxu0 0.0
    %328 = vmatpush1.xpose.msra.mxu0 0.0
    %329 = vmatprep.subr.mxu0 0.0
    %330 = vmatpush1.xpose.msra.mxu0 0.0
    %331 = vmatprep.subr.mxu0 0.0
    %332 = vmatpush1.xpose.msra.mxu0 0.0
    %333 = vmatprep.subr.mxu0 0.0
    %334 = vmatpush1.xpose.msra.mxu0 0.0
    %335 = vmatprep.subr.mxu0 0.0
    %336 = vmatpush1.xpose.msra.mxu0 0.0
    %337 = vmatprep.subr.mxu0 0.0
    %338 = vmatpush1.xpose.msra.mxu0 0.0
    %339 = vmatprep.subr.mxu0 0.0
    %340 = vmatpush1.xpose.msra.mxu0 0.0
    %341 = vmatprep.subr.mxu0 0.0
    %342 = vmatpush1.xpose.msra.mxu0 0.0
    %343 = vmatprep.subr.mxu0 0.0
    %344 = vmatpush1.xpose.msra.mxu0 0.0
    %345 = vmatprep.subr.mxu0 0.0
    %346 = vmatpush1.xpose.msra.mxu0 0.0
    %347 = vmatprep.subr.mxu0 0.0
    %348 = vmatpush1.xpose.msra.mxu0 0.0
    %349 = vmatprep.subr.mxu0 0.0
    %350 = vmatpush1.xpose.msra.mxu0 0.0
    %351 = vmatprep.subr.mxu0 0.0
    %352 = vmatpush1.xpose.msra.mxu0 0.0
    %353 = vmatprep.subr.mxu0 0.0
    %354 = vmatpush1.xpose.msra.mxu0 0.0
    %355 = vmatprep.subr.mxu0 0.0
    %356 = vmatpush1.xpose.msra.mxu0 0.0
    %357 = vmatprep.subr.mxu0 0.0
    %358 = vmatpush1.xpose.msra.mxu0 0.0
    %359 = vmatprep.subr.mxu0 0.0
    %360 = vmatpush1.xpose.msra.mxu0 0.0
    %361 = vmatprep.mubr.f32.mxu0 0.0
    %362 = vmatmul.mubr.f32.gmra.mrb[0].mxu0 %v289
    %v363 = vpop.f32.mrb[0].mxu0
    %v364 = vadd.f32 %v287, %v363
    %v365 = vpop.f32.mrb[0].mxu0
    %366 = vdwg.mxu0
    %vm367 = vcmask 122880
    %368 = vst.msk [vmem:[#allocation3] sm:$0x1] %vm367, %v364
    // Predicated region
    $region30: #{tpu_custom_call.1} parent=1 // pred_check
      _
    $region31: #{tpu_custom_call.1} parent=1 // pred_check_branch
      %370 = sbr.rel (0) target = $region33
    $region32: #{tpu_custom_call.1} parent=1 // pred_region
      %s372 = ssub.s32 16, 16
      %373 = vsyncadd [#allocation4], %s372
      %s375 = sshll.u32 [#allocation3], 4
      %s376 = int_to_ptr.vmem [resolvable:$true] %s375
      %378 = dma.vmem_to_hbm [thread:$0]  %s376, 16, %s7, [#allocation4]
    $region33: #{tpu_custom_call.1} parent=1 // pred_fallthru
      _
    // Predicated region
    $region34: #{tpu_custom_call.1} parent=1 // pred_check
      _
    $region35: #{tpu_custom_call.1} parent=1 // pred_check_branch
      %380 = sbr.rel (0) target = $region37
    $region36: #{tpu_custom_call.1} parent=1 // pred_region
      %381 = dma.done [#allocation4], 16
    $region37: #{tpu_custom_call.1} parent=1 // pred_fallthru
      _
    %382 = vsyncpa [#allocation4], 1

</llo_original>
